<compile_context>
chip_gen: v7x
topology: tpu7x:2x2x1
jax: 0.10.0
libtpu: 0.0.40
codegen_flags: <defaults>
</compile_context>

<pallas_src>
import functools

import jax
import jax.numpy as jnp
from jax.experimental import pallas as pl
from jax.experimental.pallas import tpu as pltpu


def dqn_kernel(x_ref, w1_ref, b1_ref, w2_ref, b2_ref, w3_ref, b3_ref, o_ref):
    # fc1 + ReLU.  K=6 contraction stays on the MXU: after the bf16 change the
    # MXU slot has plenty of slack here, so a VPU outer-product version would
    # only be free filler.
    x = x_ref[...].astype(jnp.bfloat16)
    h1 = jnp.dot(x, w1_ref[...], preferred_element_type=jnp.float32)
    h1 = jnp.maximum(h1 + b1_ref[...], 0.0)          # bias/ReLU in f32

    # fc2 + ReLU (128x128 bf16 on the MXU, f32 accumulate).
    h2 = jnp.dot(h1.astype(jnp.bfloat16), w2_ref[...],
                 preferred_element_type=jnp.float32)
    h2 = jnp.maximum(h2 + b2_ref[...], 0.0)

    # fc3: weights zero-padded to 128 lanes for a clean MXU shape; only the
    # real out_dim lanes are stored (narrow masked store, 12 B/row).
    out = jnp.dot(h2.astype(jnp.bfloat16), w3_ref[...],
                  preferred_element_type=jnp.float32)
    out = out + b3_ref[...]
    o_ref[...] = out[:, : o_ref.shape[-1]].astype(o_ref.dtype)


def _round_up(n, m):
    return ((n + m - 1) // m) * m


def _cdiv(a, b):
    return -(-a // b)


@functools.partial(jax.jit, static_argnames=("tm",))
def dqn_forward(x, w1, b1, w2, b2, w3, b3, *, tm=2048):
    """Fused DQN forward. Returns [batch, out_dim] float32 Q-values."""
    batch, in_dim = x.shape
    hidden = w1.shape[1]
    out_dim = w3.shape[1]

    # --- bf16 MXU operands (accumulation stays f32 inside the kernel). ---
    w1b = w1.astype(jnp.bfloat16)
    w2b = w2.astype(jnp.bfloat16)

    # fc3 weights/bias zero-padded to 128 lanes (matmul shape only; the padded
    # lanes never reach HBM because the kernel slices before the store).
    out_pad = _round_up(max(out_dim, 128), 128)
    w3p = jnp.zeros((hidden, out_pad), jnp.bfloat16).at[:, :out_dim].set(
        w3.astype(jnp.bfloat16))
    b3p = jnp.zeros((1, out_pad), jnp.float32).at[:, :out_dim].set(b3)

    # --- Batch tiling ---
    #  * batch < 256: one tile covering the whole (possibly odd-sized) batch;
    #    a block dim equal to the full array dim needs no 8-row alignment, so
    #    no jnp.pad on the small-batch inference path.
    #  * batch >= 256: an even number (>= 2) of tiles so the "parallel" grid
    #    axis can shard across v7x's two TensorCores; tile capped at `tm` so
    #    per-step overhead stays amortised.
    if batch < 2 * 128:
        tm_eff = batch
    else:
        num_tiles = max(2, _cdiv(batch, tm))
        num_tiles += num_tiles % 2
        tm_eff = _round_up(_cdiv(batch, num_tiles), 8)
    padded_batch = _round_up(batch, tm_eff)
    if padded_batch != batch:
        x = jnp.pad(x, ((0, padded_batch - batch), (0, 0)))

    grid = (padded_batch // tm_eff,)

    # Weights/biases: same block every iteration -> stay VMEM-resident.
    resident = lambda shape: pl.BlockSpec(shape, lambda i: (0, 0))

    out = pl.pallas_call(
        dqn_kernel,
        out_shape=jax.ShapeDtypeStruct((padded_batch, out_dim), jnp.float32),
        grid=grid,
        in_specs=[
            pl.BlockSpec((tm_eff, in_dim), lambda i: (i, 0)),     # x tile
            resident((in_dim, hidden)), resident((1, hidden)),    # fc1
            resident((hidden, hidden)), resident((1, hidden)),    # fc2
            resident((hidden, out_pad)), resident((1, out_pad)),  # fc3 (padded)
        ],
        out_specs=pl.BlockSpec((tm_eff, out_dim), lambda i: (i, 0)),
        compiler_params=pltpu.CompilerParams(
            dimension_semantics=("parallel",),  # shard batch tiles across TCs
        ),
    )(x, w1b, b1, w2b, b2, w3p, b3p)

    # Drop padded rows (only present on the multi-tile path).
    return out[:batch] if padded_batch != batch else out


def init_params(key, input_dim, hidden_dim, output_dim):
    """Deterministic init mimicking PyTorch Linear default (uniform +/- 1/sqrt(fan_in))."""
    ks = jax.random.split(key, 6)

    def linear(kw, kb, fan_in, fan_out):
        bound = 1.0 / jnp.sqrt(jnp.float32(fan_in))
        w = jax.random.uniform(kw, (fan_in, fan_out), jnp.float32, -bound, bound)
        b = jax.random.uniform(kb, (1, fan_out), jnp.float32, -bound, bound)
        return w, b

    w1, b1 = linear(ks[0], ks[1], input_dim, hidden_dim)
    w2, b2 = linear(ks[2], ks[3], hidden_dim, hidden_dim)
    w3, b3 = linear(ks[4], ks[5], hidden_dim, output_dim)
    return w1, b1, w2, b2, w3, b3


if __name__ == "__main__":
    # Acrobot-v1: observation dim = 6, action dim = 3.
    input_dim, hidden_dim, output_dim = 6, 128, 3

    key = jax.random.PRNGKey(0)
    kx, kp = jax.random.split(key, 2)
    params = init_params(kp, input_dim, hidden_dim, output_dim)
    w1, b1, w2, b2, w3, b3 = params

    def reference(x):   # f32 reference (kernel uses bf16 MXU inputs -> loose tol)
        h = jnp.maximum(x @ w1 + b1, 0.0)
        h = jnp.maximum(h @ w2 + b2, 0.0)
        return h @ w3 + b3

    # batch=8 : single-tile inference path; batch=5 : odd batch, no padding;
    # batch=600 : multi-tile path (2 tiles of 304 rows, 8 padded rows sliced off).
    for batch in (8, 5, 600):
        xk = jax.random.fold_in(kx, batch)
        x = jax.random.normal(xk, (batch, input_dim), dtype=jnp.float32)
        out = jax.block_until_ready(dqn_forward(x, *params))
        assert out.shape == (batch, output_dim)
        ref = reference(x)
        err = jnp.max(jnp.abs(out - ref))
        assert jnp.allclose(out, ref, atol=5e-2, rtol=5e-2), (batch, err)

    # TODO(synk): gym environment, replay buffer, optimizer and training loop are
    # host-side logic, not kernel work; only the DQN forward is implemented.
    # TODO(synk): for the RL action-selection path, fusing argmax over the 3
    # Q-values (and the target-network forward) into this pallas_call would
    # remove the remaining launch overhead.
    print("KERNEL_OK")
</pallas_src>

<mosaic_0001>
module attributes {stable_mosaic.version = 11 : i64} {
  func.func @dqn_kernel(%arg0: i32, %arg1: memref<8x6xf32, #tpu.memory_space<vmem>>, %arg2: memref<6x128xbf16, #tpu.memory_space<vmem>>, %arg3: memref<1x128xf32, #tpu.memory_space<vmem>>, %arg4: memref<128x128xbf16, #tpu.memory_space<vmem>>, %arg5: memref<1x128xf32, #tpu.memory_space<vmem>>, %arg6: memref<128x128xbf16, #tpu.memory_space<vmem>>, %arg7: memref<1x128xf32, #tpu.memory_space<vmem>>, %arg8: memref<8x3xf32, #tpu.memory_space<vmem>>) attributes {dimension_semantics = [#tpu.dimension_semantics<parallel>], iteration_bounds = array<i64: 1>, scalar_prefetch = 0 : i64, scratch_operands = 0 : i64, tpu.core_type = #tpu.core_type<tc>, window_params = [{transform_indices = @transform_0, window_bounds = array<i64: 8, 6>}, {pipeline_mode = #tpu.pipeline_mode<synchronous>, transform_indices = @transform_1, window_bounds = array<i64: 6, 128>}, {pipeline_mode = #tpu.pipeline_mode<synchronous>, transform_indices = @transform_2, window_bounds = array<i64: 1, 128>}, {pipeline_mode = #tpu.pipeline_mode<synchronous>, transform_indices = @transform_3, window_bounds = array<i64: 128, 128>}, {pipeline_mode = #tpu.pipeline_mode<synchronous>, transform_indices = @transform_4, window_bounds = array<i64: 1, 128>}, {pipeline_mode = #tpu.pipeline_mode<synchronous>, transform_indices = @transform_5, window_bounds = array<i64: 128, 128>}, {pipeline_mode = #tpu.pipeline_mode<synchronous>, transform_indices = @transform_6, window_bounds = array<i64: 1, 128>}, {transform_indices = @transform_7, window_bounds = array<i64: 8, 3>}]} {
    %c0 = arith.constant 0 : index
    %c0_0 = arith.constant 0 : index
    %0 = vector.load %arg1[%c0, %c0_0] : memref<8x6xf32, #tpu.memory_space<vmem>>, vector<8x6xf32>
    %1 = arith.truncf %0 : vector<8x6xf32> to vector<8x6xbf16>
    %c0_1 = arith.constant 0 : index
    %c0_2 = arith.constant 0 : index
    %2 = vector.load %arg2[%c0_1, %c0_2] : memref<6x128xbf16, #tpu.memory_space<vmem>>, vector<6x128xbf16>
    %cst = arith.constant dense<0.000000e+00> : vector<8x128xf32>
    %3 = tpu.matmul %1, %2, %cst {dimension_numbers = #tpu.dot_dimension_numbers<[1], [0], [0], [1], [0, 0, 1, 1], [], []>} : vector<8x6xbf16>, vector<6x128xbf16>, vector<8x128xf32> -> vector<8x128xf32>
    %c0_3 = arith.constant 0 : index
    %c0_4 = arith.constant 0 : index
    %4 = vector.load %arg3[%c0_3, %c0_4] : memref<1x128xf32, #tpu.memory_space<vmem>>, vector<1x128xf32>
    %5 = vector.broadcast %4 : vector<1x128xf32> to vector<8x128xf32>
    %6 = arith.addf %3, %5 : vector<8x128xf32>
    %cst_5 = arith.constant 0.000000e+00 : f32
    %7 = vector.broadcast %cst_5 : f32 to vector<8x128xf32>
    %8 = arith.maximumf %6, %7 : vector<8x128xf32>
    %9 = arith.truncf %8 : vector<8x128xf32> to vector<8x128xbf16>
    %c0_6 = arith.constant 0 : index
    %c0_7 = arith.constant 0 : index
    %10 = vector.load %arg4[%c0_6, %c0_7] : memref<128x128xbf16, #tpu.memory_space<vmem>>, vector<128x128xbf16>
    %cst_8 = arith.constant dense<0.000000e+00> : vector<8x128xf32>
    %11 = tpu.matmul %9, %10, %cst_8 {dimension_numbers = #tpu.dot_dimension_numbers<[1], [0], [0], [1], [0, 0, 1, 1], [], []>} : vector<8x128xbf16>, vector<128x128xbf16>, vector<8x128xf32> -> vector<8x128xf32>
    %c0_9 = arith.constant 0 : index
    %c0_10 = arith.constant 0 : index
    %12 = vector.load %arg5[%c0_9, %c0_10] : memref<1x128xf32, #tpu.memory_space<vmem>>, vector<1x128xf32>
    %13 = vector.broadcast %12 : vector<1x128xf32> to vector<8x128xf32>
    %14 = arith.addf %11, %13 : vector<8x128xf32>
    %cst_11 = arith.constant 0.000000e+00 : f32
    %15 = vector.broadcast %cst_11 : f32 to vector<8x128xf32>
    %16 = arith.maximumf %14, %15 : vector<8x128xf32>
    %17 = arith.truncf %16 : vector<8x128xf32> to vector<8x128xbf16>
    %c0_12 = arith.constant 0 : index
    %c0_13 = arith.constant 0 : index
    %18 = vector.load %arg6[%c0_12, %c0_13] : memref<128x128xbf16, #tpu.memory_space<vmem>>, vector<128x128xbf16>
    %cst_14 = arith.constant dense<0.000000e+00> : vector<8x128xf32>
    %19 = tpu.matmul %17, %18, %cst_14 {dimension_numbers = #tpu.dot_dimension_numbers<[1], [0], [0], [1], [0, 0, 1, 1], [], []>} : vector<8x128xbf16>, vector<128x128xbf16>, vector<8x128xf32> -> vector<8x128xf32>
    %c0_15 = arith.constant 0 : index
    %c0_16 = arith.constant 0 : index
    %20 = vector.load %arg7[%c0_15, %c0_16] : memref<1x128xf32, #tpu.memory_space<vmem>>, vector<1x128xf32>
    %21 = vector.broadcast %20 : vector<1x128xf32> to vector<8x128xf32>
    %22 = arith.addf %19, %21 : vector<8x128xf32>
    %23 = vector.extract_strided_slice %22 {offsets = [0, 0], sizes = [8, 3], strides = [1, 1]} : vector<8x128xf32> to vector<8x3xf32>
    %c0_17 = arith.constant 0 : index
    %c0_18 = arith.constant 0 : index
    %24 = vector.load %arg8[%c0_17, %c0_18] : memref<8x3xf32, #tpu.memory_space<vmem>>, vector<8x3xf32>
    tpu.vector_store %arg8[%c0_17, %c0_18], %23 {strides = array<i32>} : memref<8x3xf32, #tpu.memory_space<vmem>>, vector<8x3xf32>,
    return
  }
  func.func @transform_0(%arg0: i32) -> (i32, i32) {
    %c0_i32 = arith.constant 0 : i32
    %c0_i32_0 = arith.constant 0 : i32
    return %arg0, %c0_i32 : i32, i32
  }
  func.func @transform_1(%arg0: i32) -> (i32, i32) {
    %c0_i32 = arith.constant 0 : i32
    %c0_i32_0 = arith.constant 0 : i32
    %c0_i32_1 = arith.constant 0 : i32
    return %c0_i32, %c0_i32_0 : i32, i32
  }
  func.func @transform_2(%arg0: i32) -> (i32, i32) {
    %c0_i32 = arith.constant 0 : i32
    %c0_i32_0 = arith.constant 0 : i32
    %c0_i32_1 = arith.constant 0 : i32
    return %c0_i32, %c0_i32_0 : i32, i32
  }
  func.func @transform_3(%arg0: i32) -> (i32, i32) {
    %c0_i32 = arith.constant 0 : i32
    %c0_i32_0 = arith.constant 0 : i32
    %c0_i32_1 = arith.constant 0 : i32
    return %c0_i32, %c0_i32_0 : i32, i32
  }
  func.func @transform_4(%arg0: i32) -> (i32, i32) {
    %c0_i32 = arith.constant 0 : i32
    %c0_i32_0 = arith.constant 0 : i32
    %c0_i32_1 = arith.constant 0 : i32
    return %c0_i32, %c0_i32_0 : i32, i32
  }
  func.func @transform_5(%arg0: i32) -> (i32, i32) {
    %c0_i32 = arith.constant 0 : i32
    %c0_i32_0 = arith.constant 0 : i32
    %c0_i32_1 = arith.constant 0 : i32
    return %c0_i32, %c0_i32_0 : i32, i32
  }
  func.func @transform_6(%arg0: i32) -> (i32, i32) {
    %c0_i32 = arith.constant 0 : i32
    %c0_i32_0 = arith.constant 0 : i32
    %c0_i32_1 = arith.constant 0 : i32
    return %c0_i32, %c0_i32_0 : i32, i32
  }
  func.func @transform_7(%arg0: i32) -> (i32, i32) {
    %c0_i32 = arith.constant 0 : i32
    %c0_i32_0 = arith.constant 0 : i32
    return %arg0, %c0_i32 : i32, i32
  }
}

</mosaic_0001>

<llo_original>
// kernel: dqn_forward.1
$region0: #{dqn_forward.1}
  #allocation0 [shape = 'u32[]', space=smem, size = 0x4, offset = 0x4, fixed_abs, tag = 'smem constant byte address 0x4 - core index']
  #allocation1 [shape = 'u32[144,128]{1,0:T(1,128)}', space=vmem, size = 0x12000, scoped, tag = 'internal scratch']
  %s0 = inlined_call_operand.vmem [shape: f32[8,6], index: 0, kind: input, shape index: {}]
  %s1 = inlined_call_operand.vmem [shape: bf16[6,128], index: 1, kind: input, shape index: {}]
  %s2 = inlined_call_operand.vmem [shape: f32[1,128], index: 2, kind: input, shape index: {}]
  %s3 = inlined_call_operand.vmem [shape: bf16[128,128], index: 3, kind: input, shape index: {}]
  %s4 = inlined_call_operand.vmem [shape: f32[1,128], index: 4, kind: input, shape index: {}]
  %s5 = inlined_call_operand.vmem [shape: bf16[128,128], index: 5, kind: input, shape index: {}]
  %s6 = inlined_call_operand.vmem [shape: f32[1,128], index: 6, kind: input, shape index: {}]
  %s7 = inlined_call_operand.vmem [shape: f32[8,3], index: 7, kind: output, shape index: {}]
  %s8 = sld [smem:[#allocation0]]
  $region38: #{dqn_forward.1} parent=0
    _
  %s10 = ssub.s32 1, %s8
  %s11 = scalar_select 0, %s10, %s8
  // Predicated region
  $region2: #{dqn_forward.1} parent=0 // pred_check
    _
  $region3: #{dqn_forward.1} parent=0 // pred_check_branch
    %13 = sbr.rel (0) target = $region5
  $region4: #{dqn_forward.1} parent=0 // pred_region
    _
  $region5: #{dqn_forward.1} parent=0 // pred_fallthru
    _
  // Predicated region
  $region6: #{dqn_forward.1} parent=0 // pred_check
    _
  $region7: #{dqn_forward.1} parent=0 // pred_check_branch
    %15 = sbr.rel (0) target = $region9
  $region8: #{dqn_forward.1} parent=0 // pred_region
    _
  $region9: #{dqn_forward.1} parent=0 // pred_fallthru
    _
  // Predicated region
  $region10: #{dqn_forward.1} parent=0 // pred_check
    _
  $region11: #{dqn_forward.1} parent=0 // pred_check_branch
    %17 = sbr.rel (0) target = $region13
  $region12: #{dqn_forward.1} parent=0 // pred_region
    _
  $region13: #{dqn_forward.1} parent=0 // pred_fallthru
    _
  // Predicated region
  $region14: #{dqn_forward.1} parent=0 // pred_check
    _
  $region15: #{dqn_forward.1} parent=0 // pred_check_branch
    %19 = sbr.rel (0) target = $region17
  $region16: #{dqn_forward.1} parent=0 // pred_region
    _
  $region17: #{dqn_forward.1} parent=0 // pred_fallthru
    _
  // Predicated region
  $region18: #{dqn_forward.1} parent=0 // pred_check
    _
  $region19: #{dqn_forward.1} parent=0 // pred_check_branch
    %21 = sbr.rel (0) target = $region21
  $region20: #{dqn_forward.1} parent=0 // pred_region
    _
  $region21: #{dqn_forward.1} parent=0 // pred_fallthru
    _
  // Predicated region
  $region22: #{dqn_forward.1} parent=0 // pred_check
    _
  $region23: #{dqn_forward.1} parent=0 // pred_check_branch
    %23 = sbr.rel (0) target = $region25
  $region24: #{dqn_forward.1} parent=0 // pred_region
    _
  $region25: #{dqn_forward.1} parent=0 // pred_fallthru
    _
  // Predicated region
  $region26: #{dqn_forward.1} parent=0 // pred_check
    _
  $region27: #{dqn_forward.1} parent=0 // pred_check_branch
    %25 = sbr.rel (0) target = $region29
  $region28: #{dqn_forward.1} parent=0 // pred_region
    _
  $region29: #{dqn_forward.1} parent=0 // pred_fallthru
    _
  %v27 = vld [vmem:[%s0] sm:$0xff]
  %v28 = vpack.c.bf16 %v27, %v27
  %v29 = vld [vmem:[%s1] sm:$0x7]
  %v30 = vld [vmem:[%s2] sm:$0x1]
  %v32 = vlaneseq
  %v33 = vshrl.u32 %v32, 7
  %v34 = vsub.s32 0, %v33
  %v35 = vrot.slane %v30, %v34
  %vm37 = vcmask 48128
  %v39 = vsel %vm37, %v28, 0
  %vm41 = vcmask 1042432
  %v43 = vsel %vm41, %v29, 0
  %45 = vmatprep.subr.bf16.mxu0 0
  %46 = vmatpush1.bf16.msra.mxu0 %v43
  %47 = vmatprep.subr.bf16.mxu0 0
  %48 = vmatpush1.bf16.msra.mxu0 0
  %49 = vmatprep.subr.bf16.mxu0 0
  %50 = vmatpush1.bf16.msra.mxu0 0
  %51 = vmatprep.subr.bf16.mxu0 0
  %52 = vmatpush1.bf16.msra.mxu0 0
  %53 = vmatprep.subr.bf16.mxu0 0
  %54 = vmatpush1.bf16.msra.mxu0 0
  %55 = vmatprep.subr.bf16.mxu0 0
  %56 = vmatpush1.bf16.msra.mxu0 0
  %57 = vmatprep.subr.bf16.mxu0 0
  %58 = vmatpush1.bf16.msra.mxu0 0
  %59 = vmatprep.subr.bf16.mxu0 0
  %60 = vmatpush1.bf16.msra.mxu0 0
  %61 = vmatprep.subr.bf16.mxu0 0
  %62 = vmatpush1.bf16.msra.mxu0 0
  %63 = vmatprep.subr.bf16.mxu0 0
  %64 = vmatpush1.bf16.msra.mxu0 0
  %65 = vmatprep.subr.bf16.mxu0 0
  %66 = vmatpush1.bf16.msra.mxu0 0
  %67 = vmatprep.subr.bf16.mxu0 0
  %68 = vmatpush1.bf16.msra.mxu0 0
  %69 = vmatprep.subr.bf16.mxu0 0
  %70 = vmatpush1.bf16.msra.mxu0 0
  %71 = vmatprep.subr.bf16.mxu0 0
  %72 = vmatpush1.bf16.msra.mxu0 0
  %73 = vmatprep.subr.bf16.mxu0 0
  %74 = vmatpush1.bf16.msra.mxu0 0
  %75 = vmatprep.subr.bf16.mxu0 0
  %76 = vmatpush1.bf16.msra.mxu0 0
  %77 = vmatprep.mubr.bf16.mxu0 0
  %78 = vmatmul.mubr.bf16.gmra.mrb[0].mxu0 %v39
  %v79 = vpop.f32.mrb[0].mxu0
  %v80 = vadd.f32 %v35, %v79
  %v81 = vpop.f32.mrb[0].mxu0
  %v82 = vpop.f32.mrb[0].mxu0
  %v83 = vpop.f32.mrb[0].mxu0
  %84 = vdwg.mxu0
  %v85 = vmax.f32 %v80, 0.0
  %v86 = vpack.c.bf16 %v85, %v85
  %v87 = vld [vmem:[%s3] sm:$0xf]
  %v88 = vld [vmem:[%s3 + $0x4] sm:$0xf]
  %v89 = vld [vmem:[%s3 + $0x8] sm:$0xf]
  %v90 = vld [vmem:[%s3 + $0xc] sm:$0xf]
  %v91 = vld [vmem:[%s3 + $0x10] sm:$0xf]
  %v92 = vld [vmem:[%s3 + $0x14] sm:$0xf]
  %v93 = vld [vmem:[%s3 + $0x18] sm:$0xf]
  %v94 = vld [vmem:[%s3 + $0x1c] sm:$0xf]
  %v95 = vld [vmem:[%s3 + $0x20] sm:$0xf]
  %v96 = vld [vmem:[%s3 + $0x24] sm:$0xf]
  %v97 = vld [vmem:[%s3 + $0x28] sm:$0xf]
  %v98 = vld [vmem:[%s3 + $0x2c] sm:$0xf]
  %v99 = vld [vmem:[%s3 + $0x30] sm:$0xf]
  %v100 = vld [vmem:[%s3 + $0x34] sm:$0xf]
  %v101 = vld [vmem:[%s3 + $0x38] sm:$0xf]
  %v102 = vld [vmem:[%s3 + $0x3c] sm:$0xf]
  %v103 = vld [vmem:[%s4] sm:$0x1]
  %v105 = vlaneseq
  %v106 = vshrl.u32 %v105, 7
  %v107 = vsub.s32 0, %v106
  %v108 = vrot.slane %v103, %v107
  %v126 = vunpack.c.l.b16 %v87
  %v127 = vunpack.c.l.b16 %v88
  %v128 = vunpack.c.l.b16 %v89
  %v129 = vunpack.c.l.b16 %v90
  %v130 = vunpack.c.l.b16 %v91
  %v131 = vunpack.c.l.b16 %v92
  %v132 = vunpack.c.l.b16 %v93
  %v133 = vunpack.c.l.b16 %v94
  %v134 = vunpack.c.l.b16 %v95
  %v135 = vunpack.c.l.b16 %v96
  %v136 = vunpack.c.l.b16 %v97
  %v137 = vunpack.c.l.b16 %v98
  %v138 = vunpack.c.l.b16 %v99
  %v139 = vunpack.c.l.b16 %v100
  %v140 = vunpack.c.l.b16 %v101
  %v141 = vunpack.c.l.b16 %v102
  %v142 = vpack.c.b16 %v127, %v126
  %v143 = vpack.c.b16 %v129, %v128
  %v144 = vpack.c.b16 %v131, %v130
  %v145 = vpack.c.b16 %v133, %v132
  %v146 = vpack.c.b16 %v135, %v134
  %v147 = vpack.c.b16 %v137, %v136
  %v148 = vpack.c.b16 %v139, %v138
  %v149 = vpack.c.b16 %v141, %v140
  %158 = vmatprep.subr.bf16.mxu0 0
  %159 = vmatpush1.bf16.msra.mxu0 %v142
  %160 = vmatprep.subr.bf16.mxu0 0
  %161 = vmatpush1.bf16.msra.mxu0 %v143
  %162 = vmatprep.subr.bf16.mxu0 0
  %163 = vmatpush1.bf16.msra.mxu0 %v144
  %164 = vmatprep.subr.bf16.mxu0 0
  %165 = vmatpush1.bf16.msra.mxu0 %v145
  %166 = vmatprep.subr.bf16.mxu0 0
  %167 = vmatpush1.bf16.msra.mxu0 %v146
  %168 = vmatprep.subr.bf16.mxu0 0
  %169 = vmatpush1.bf16.msra.mxu0 %v147
  %170 = vmatprep.subr.bf16.mxu0 0
  %171 = vmatpush1.bf16.msra.mxu0 %v148
  %172 = vmatprep.subr.bf16.mxu0 0
  %173 = vmatpush1.bf16.msra.mxu0 %v149
  %174 = vmatprep.subr.bf16.mxu0 0
  %175 = vmatpush1.bf16.msra.mxu0 0
  %176 = vmatprep.subr.bf16.mxu0 0
  %177 = vmatpush1.bf16.msra.mxu0 0
  %178 = vmatprep.subr.bf16.mxu0 0
  %179 = vmatpush1.bf16.msra.mxu0 0
  %180 = vmatprep.subr.bf16.mxu0 0
  %181 = vmatpush1.bf16.msra.mxu0 0
  %182 = vmatprep.subr.bf16.mxu0 0
  %183 = vmatpush1.bf16.msra.mxu0 0
  %184 = vmatprep.subr.bf16.mxu0 0
  %185 = vmatpush1.bf16.msra.mxu0 0
  %186 = vmatprep.subr.bf16.mxu0 0
  %187 = vmatpush1.bf16.msra.mxu0 0
  %188 = vmatprep.subr.bf16.mxu0 0
  %189 = vmatpush1.bf16.msra.mxu0 0
  %190 = vmatprep.mubr.bf16.mxu0 0
  %191 = vmatmul.mubr.bf16.gmra.mrb[0].mxu0 %v86
  %v192 = vpop.f32.mrb[0].mxu0
  %v193 = vadd.f32 %v108, %v192
  %v194 = vpop.f32.mrb[0].mxu0
  %v195 = vpop.f32.mrb[0].mxu0
  %v196 = vpop.f32.mrb[0].mxu0
  %197 = vdwg.mxu0
  %v198 = vmax.f32 %v193, 0.0
  %v199 = vpack.c.bf16 %v198, %v198
  %v200 = vld [vmem:[%s5] sm:$0xf]
  %v201 = vld [vmem:[%s5 + $0x4] sm:$0xf]
  %v202 = vld [vmem:[%s5 + $0x8] sm:$0xf]
  %v203 = vld [vmem:[%s5 + $0xc] sm:$0xf]
  %v204 = vld [vmem:[%s5 + $0x10] sm:$0xf]
  %v205 = vld [vmem:[%s5 + $0x14] sm:$0xf]
  %v206 = vld [vmem:[%s5 + $0x18] sm:$0xf]
  %v207 = vld [vmem:[%s5 + $0x1c] sm:$0xf]
  %v208 = vld [vmem:[%s5 + $0x20] sm:$0xf]
  %v209 = vld [vmem:[%s5 + $0x24] sm:$0xf]
  %v210 = vld [vmem:[%s5 + $0x28] sm:$0xf]
  %v211 = vld [vmem:[%s5 + $0x2c] sm:$0xf]
  %v212 = vld [vmem:[%s5 + $0x30] sm:$0xf]
  %v213 = vld [vmem:[%s5 + $0x34] sm:$0xf]
  %v214 = vld [vmem:[%s5 + $0x38] sm:$0xf]
  %v215 = vld [vmem:[%s5 + $0x3c] sm:$0xf]
  %v216 = vld [vmem:[%s6] sm:$0x1]
  %v218 = vlaneseq
  %v219 = vshrl.u32 %v218, 7
  %v220 = vsub.s32 0, %v219
  %v221 = vrot.slane %v216, %v220
  %v239 = vunpack.c.l.b16 %v200
  %v240 = vunpack.c.l.b16 %v201
  %v241 = vunpack.c.l.b16 %v202
  %v242 = vunpack.c.l.b16 %v203
  %v243 = vunpack.c.l.b16 %v204
  %v244 = vunpack.c.l.b16 %v205
  %v245 = vunpack.c.l.b16 %v206
  %v246 = vunpack.c.l.b16 %v207
  %v247 = vunpack.c.l.b16 %v208
  %v248 = vunpack.c.l.b16 %v209
  %v249 = vunpack.c.l.b16 %v210
  %v250 = vunpack.c.l.b16 %v211
  %v251 = vunpack.c.l.b16 %v212
  %v252 = vunpack.c.l.b16 %v213
  %v253 = vunpack.c.l.b16 %v214
  %v254 = vunpack.c.l.b16 %v215
  %v255 = vpack.c.b16 %v240, %v239
  %v256 = vpack.c.b16 %v242, %v241
  %v257 = vpack.c.b16 %v244, %v243
  %v258 = vpack.c.b16 %v246, %v245
  %v259 = vpack.c.b16 %v248, %v247
  %v260 = vpack.c.b16 %v250, %v249
  %v261 = vpack.c.b16 %v252, %v251
  %v262 = vpack.c.b16 %v254, %v253
  %271 = vmatprep.subr.bf16.mxu0 0
  %272 = vmatpush1.bf16.msra.mxu0 %v255
  %273 = vmatprep.subr.bf16.mxu0 0
  %274 = vmatpush1.bf16.msra.mxu0 %v256
  %275 = vmatprep.subr.bf16.mxu0 0
  %276 = vmatpush1.bf16.msra.mxu0 %v257
  %277 = vmatprep.subr.bf16.mxu0 0
  %278 = vmatpush1.bf16.msra.mxu0 %v258
  %279 = vmatprep.subr.bf16.mxu0 0
  %280 = vmatpush1.bf16.msra.mxu0 %v259
  %281 = vmatprep.subr.bf16.mxu0 0
  %282 = vmatpush1.bf16.msra.mxu0 %v260
  %283 = vmatprep.subr.bf16.mxu0 0
  %284 = vmatpush1.bf16.msra.mxu0 %v261
  %285 = vmatprep.subr.bf16.mxu0 0
  %286 = vmatpush1.bf16.msra.mxu0 %v262
  %287 = vmatprep.subr.bf16.mxu0 0
  %288 = vmatpush1.bf16.msra.mxu0 0
  %289 = vmatprep.subr.bf16.mxu0 0
  %290 = vmatpush1.bf16.msra.mxu0 0
  %291 = vmatprep.subr.bf16.mxu0 0
  %292 = vmatpush1.bf16.msra.mxu0 0
  %293 = vmatprep.subr.bf16.mxu0 0
  %294 = vmatpush1.bf16.msra.mxu0 0
  %295 = vmatprep.subr.bf16.mxu0 0
  %296 = vmatpush1.bf16.msra.mxu0 0
  %297 = vmatprep.subr.bf16.mxu0 0
  %298 = vmatpush1.bf16.msra.mxu0 0
  %299 = vmatprep.subr.bf16.mxu0 0
  %300 = vmatpush1.bf16.msra.mxu0 0
  %301 = vmatprep.subr.bf16.mxu0 0
  %302 = vmatpush1.bf16.msra.mxu0 0
  %303 = vmatprep.mubr.bf16.mxu0 0
  %304 = vmatmul.mubr.bf16.gmra.mrb[0].mxu0 %v199
  %v305 = vpop.f32.mrb[0].mxu0
  %v306 = vadd.f32 %v221, %v305
  %v307 = vpop.f32.mrb[0].mxu0
  %v308 = vpop.f32.mrb[0].mxu0
  %v309 = vpop.f32.mrb[0].mxu0
  %310 = vdwg.mxu0
  %vm311 = vcmask 23552
  %312 = vst.msk [vmem:[%s7] sm:$0xff] %vm311, %v306
  // Predicated region
  $region30: #{dqn_forward.1} parent=0 // pred_check
    _
  $region31: #{dqn_forward.1} parent=0 // pred_check_branch
    %314 = sbr.rel (0) target = $region33
  $region32: #{dqn_forward.1} parent=0 // pred_region
    _
  $region33: #{dqn_forward.1} parent=0 // pred_fallthru
    _
  // Predicated region
  $region34: #{dqn_forward.1} parent=0 // pred_check
    _
  $region35: #{dqn_forward.1} parent=0 // pred_check_branch
    %316 = sbr.rel (0) target = $region37
  $region36: #{dqn_forward.1} parent=0 // pred_region
    _
  $region37: #{dqn_forward.1} parent=0 // pred_fallthru
    _

</llo_original>
